<compile_context>
chip_gen: v7x
topology: tpu7x:2x2x1
jax: 0.10.0
libtpu: 0.0.40
codegen_flags: <defaults>
</compile_context>

<pallas_src>
import functools
import math

import numpy as np
import jax
import jax.numpy as jnp
from jax.experimental import pallas as pl
from jax.experimental.pallas import tpu as pltpu


_ROW_TILE = 1024                   # row tile for streaming matmuls
_PAIR_TILE = 1024                  # pair-dim tile for the fused attention kernel


@functools.lru_cache(maxsize=1)
def _vmem_limit():
    """3/4 of physical VMEM (capped), falling back to a known-safe 32 MiB."""
    try:
        cap = int(pltpu.get_tpu_info().vmem_capacity_bytes)
        return int(min(cap * 3 // 4, 100 * 1024 * 1024))
    except Exception:
        return 32 * 1024 * 1024


def _round_up(x, m):
    return (x + m - 1) // m * m


def _pad_rows(a, rows):
    pad = rows - a.shape[0]
    if pad == 0:
        return a
    return jnp.pad(a, ((0, pad),) + ((0, 0),) * (a.ndim - 1))


def _row_tiling(m, max_tile):
    """Return (padded_rows, tile_rows): full block if small, 128-aligned tiles otherwise."""
    mp = _round_up(max(m, 8), 8)
    if mp <= max_tile:
        return mp, mp
    mp = _round_up(m, max_tile)
    return mp, max_tile


# ----------------------------- linear kernels ------------------------------

def _linear_kernel(x_ref, w_ref, b_ref, o_ref):
    o_ref[...] = (
        jnp.dot(x_ref[...], w_ref[...], preferred_element_type=jnp.float32)
        + b_ref[...]
    )


def linear(x, w, b):
    """y = x @ w + b, row-tiled (weights resident, rows streamed/pipelined)."""
    m, k = x.shape
    n = w.shape[1]
    mp, tm = _row_tiling(m, _ROW_TILE)
    out = pl.pallas_call(
        _linear_kernel,
        out_shape=jax.ShapeDtypeStruct((mp, n), jnp.float32),
        grid=(mp // tm,),
        in_specs=[
            pl.BlockSpec((tm, k), lambda i: (i, 0)),
            pl.BlockSpec((k, n), lambda i: (0, 0)),
            pl.BlockSpec((1, n), lambda i: (0, 0)),
        ],
        out_specs=pl.BlockSpec((tm, n), lambda i: (i, 0)),
        compiler_params=pltpu.CompilerParams(
            dimension_semantics=("parallel",),
            vmem_limit_bytes=_vmem_limit()),
    )(_pad_rows(x, mp), w, b.reshape(1, n))
    return out[:m]


def _linear3_kernel(x1_ref, x2_ref, x3_ref, w1_ref, w2_ref, w3_ref, b_ref, o_ref):
    o_ref[...] = (
        jnp.dot(x1_ref[...], w1_ref[...], preferred_element_type=jnp.float32)
        + jnp.dot(x2_ref[...], w2_ref[...], preferred_element_type=jnp.float32)
        + jnp.dot(x3_ref[...], w3_ref[...], preferred_element_type=jnp.float32)
        + b_ref[...]
    )


def linear3(x1, x2, x3, w1, w2, w3, b):
    """cat([x1,x2,x3],1) @ cat([w1;w2;w3],0) + b without materializing the concat."""
    m, k = x1.shape
    k3 = x3.shape[1]
    n = w1.shape[1]
    mp, tm = _row_tiling(m, _ROW_TILE)
    row_spec = lambda i: (i, 0)
    full_spec = lambda i: (0, 0)
    out = pl.pallas_call(
        _linear3_kernel,
        out_shape=jax.ShapeDtypeStruct((mp, n), jnp.float32),
        grid=(mp // tm,),
        in_specs=[
            pl.BlockSpec((tm, k), row_spec),
            pl.BlockSpec((tm, k), row_spec),
            pl.BlockSpec((tm, k3), row_spec),
            pl.BlockSpec((k, n), full_spec),
            pl.BlockSpec((k, n), full_spec),
            pl.BlockSpec((k3, n), full_spec),
            pl.BlockSpec((1, n), full_spec),
        ],
        out_specs=pl.BlockSpec((tm, n), row_spec),
        compiler_params=pltpu.CompilerParams(
            dimension_semantics=("parallel",),
            vmem_limit_bytes=_vmem_limit()),
    )(_pad_rows(x1, mp), _pad_rows(x2, mp), _pad_rows(x3, mp),
      w1, w2, w3, b.reshape(1, n))
    return out[:m]


# ------------------------ fused attention kernel ----------------------------

def _attn_fused_kernel(qd_ref, ks_ref, c_ref, vs_ref, oh_ref, ssel_ref, bsel_ref,
                       ex_ref, gden_ref, wvu_ref, *, clamp):
    """Single pass over pair tiles.

    Produces per-pair exp(score) [H, tm], accumulates f32 softmax denominators
    gden [H, N] and unnormalized wV scatter wvu [HD, N].  All contractions are
    standard matmuls with the long axis on lanes (no masked narrow stores).
    """
    @pl.when(pl.program_id(0) == 0)
    def _():
        gden_ref[...] = jnp.zeros_like(gden_ref)
        wvu_ref[...] = jnp.zeros_like(wvu_ref)

    # elementwise math in f32 (v5e has no bf16 VPU/EUP path): [HD, tm]
    prod = ks_ref[...] * qd_ref[...] * c_ref[...]

    # per-head reduction over out_dim as one MXU matmul; 1/sqrt(out_dim) is
    # folded into the selector.  [H, HD] @ [HD, tm] -> [H, tm]
    score = jnp.dot(ssel_ref[...], prod, preferred_element_type=jnp.float32)
    # |score| <= clamp so exp never overflows and the grouped softmax is
    # shift-invariant -> no segment-max pass needed.
    score = jnp.clip(score, -clamp, clamp)
    ex = jnp.exp(score)
    ex_ref[...] = ex                                           # lane-dense [H, tm]

    oh = oh_ref[...]                                           # [tm, N] bf16 0/1
    # softmax denominators stay f32 end-to-end: [H, tm] @ [tm, N] -> [H, N]
    gden_ref[...] += jnp.dot(ex, oh.astype(jnp.float32),
                             preferred_element_type=jnp.float32)

    # broadcast per-head exp across out_dim rows: [HD, H] @ [H, tm] -> [HD, tm]
    ex_b = jnp.dot(bsel_ref[...], ex, preferred_element_type=jnp.float32)
    msg = (vs_ref[...] * ex_b).astype(jnp.bfloat16)
    # unnormalized scatter-add onto query nodes: [HD, tm] @ [tm, N] -> [HD, N]
    wvu_ref[...] += jnp.dot(msg, oh, preferred_element_type=jnp.float32)


# ------------------------------ forward pass -------------------------------

def forward(params, x, edge_index, edge_attr, key_idx, query_idx, connectivity,
            *, num_heads, out_dim, clamp):
    hd = num_heads * out_dim
    in_dim = x.shape[1]
    n_nodes = x.shape[0]
    m_pairs = key_idx.shape[0]

    # act = Identity (module default act=None), dropout p=0 -> identity.
    # T and Q share input x: one fused row-tiled matmul (x streamed once).
    TQ = linear(x,
                jnp.concatenate([params["T_w"], params["Q_w"]], axis=1),
                jnp.concatenate([params["T_b"], params["Q_b"]]))
    Tx, Q_h = TQ[:, :in_dim], TQ[:, in_dim:]
    Ee = linear(edge_attr, params["E_w"], params["E_b"])
    x1 = Tx[edge_index[0]]
    x2 = Tx[edge_index[1]]
    Z = linear3(x1, x2, Ee,
                params["P_w"][:in_dim],
                params["P_w"][in_dim:2 * in_dim],
                params["P_w"][2 * in_dim:],
                params["P_b"])
    KV = linear(Z,
                jnp.concatenate([params["K_w"], params["V_w"]], axis=1),
                jnp.concatenate([params["K_b"], params["V_b"]]))      # fused K/V
    K_h, V_h = KV[:, :hd], KV[:, hd:]

    # data-dependent gathers stay in plain JAX glue; pair-tiled operands are
    # fed transposed so the pair axis lands on lanes inside the kernel.
    mp, tm = _row_tiling(m_pairs, _PAIR_TILE)

    def pad_t(a):                                   # [M, HD] -> [HD, mp]
        return _pad_rows(a, mp).T

    qd_t = pad_t(Q_h[query_idx])
    ks_t = pad_t(K_h[key_idx])
    vs_t = pad_t(V_h[key_idx])
    c_t = pad_t(params["A_w"][connectivity])

    # membership matrix pairs x nodes; padded pair rows are all-zero so they
    # contribute nothing to gden / wvu.
    q_pad = jnp.full((mp,), -1, jnp.int32).at[:m_pairs].set(query_idx.astype(jnp.int32))
    oh_t = (q_pad[:, None] == jnp.arange(n_nodes)[None, :]).astype(jnp.bfloat16)

    # static 0/1 head selectors, built once at trace time (numpy constants);
    # 1/sqrt(out_dim) folded into the reduction selector.
    head_of = np.arange(hd) // out_dim
    memb = (head_of[None, :] == np.arange(num_heads)[:, None])        # [H, HD]
    ssel = jnp.asarray(memb.astype(np.float32) / math.sqrt(out_dim))  # [H, HD]
    bsel = jnp.asarray(memb.T.astype(np.float32))                     # [HD, H]

    pair_spec = pl.BlockSpec((hd, tm), lambda i: (0, i))

    ex, gden, wvu = pl.pallas_call(
        functools.partial(_attn_fused_kernel, clamp=clamp),
        out_shape=(
            jax.ShapeDtypeStruct((num_heads, mp), jnp.float32),        # ex
            jax.ShapeDtypeStruct((num_heads, n_nodes), jnp.float32),   # gden
            jax.ShapeDtypeStruct((hd, n_nodes), jnp.float32),          # wvu
        ),
        grid=(mp // tm,),
        in_specs=[pair_spec, pair_spec, pair_spec, pair_spec,
                  pl.BlockSpec((tm, n_nodes), lambda i: (i, 0)),       # oh_t
                  pl.BlockSpec((num_heads, hd), lambda i: (0, 0)),     # ssel
                  pl.BlockSpec((hd, num_heads), lambda i: (0, 0))],    # bsel
        out_specs=(pl.BlockSpec((num_heads, tm), lambda i: (0, i)),
                   pl.BlockSpec((num_heads, n_nodes), lambda i: (0, 0)),
                   pl.BlockSpec((hd, n_nodes), lambda i: (0, 0))),
        compiler_params=pltpu.CompilerParams(
            dimension_semantics=("arbitrary",),
            vmem_limit_bytes=_vmem_limit()),
    )(qd_t, ks_t, c_t, vs_t, oh_t, ssel, bsel)

    # tiny elementwise / gather normalization in JAX glue (O(M*H) / O(N*HD));
    # padded pair columns of ex are sliced away before normalization.
    attn = ex[:, :m_pairs].T / (gden.T[query_idx] + 1e-16)            # [M, H]
    gden_b = jnp.repeat(gden, out_dim, axis=0)                        # [HD, N]
    wV = (wvu / (gden_b + 1e-16)).T.reshape(n_nodes, num_heads, out_dim)
    return wV, Z, attn


# -------------------------- pure-JAX reference -----------------------------

def reference_forward(params, x, edge_index, edge_attr, key_idx, query_idx,
                      connectivity, *, num_heads, out_dim, clamp):
    n_nodes = x.shape[0]
    Tx = x @ params["T_w"] + params["T_b"]
    x1 = Tx[edge_index[0]]
    x2 = Tx[edge_index[1]]
    Ee = edge_attr @ params["E_w"] + params["E_b"]
    Z = jnp.concatenate([x1, x2, Ee], axis=1) @ params["P_w"] + params["P_b"]
    Q_h = (x @ params["Q_w"] + params["Q_b"]).reshape(-1, num_heads, out_dim)
    K_h = (Z @ params["K_w"] + params["K_b"]).reshape(-1, num_heads, out_dim)
    V_h = (Z @ params["V_w"] + params["V_b"]).reshape(-1, num_heads, out_dim)

    src = K_h[key_idx]
    dest = Q_h[query_idx]
    score = src * dest / math.sqrt(out_dim)
    c = params["A_w"][connectivity].reshape(-1, num_heads, out_dim)
    score = (score * c).sum(-1, keepdims=True)             # [M, H, 1]
    score = jnp.clip(score, -clamp, clamp)
    smax = jax.ops.segment_max(score, query_idx, num_segments=n_nodes)[query_idx]
    ex = jnp.exp(score - smax)
    den = jax.ops.segment_sum(ex, query_idx, num_segments=n_nodes)[query_idx]
    attn = ex / (den + 1e-16)
    msg = V_h[key_idx] * attn
    wV = jax.ops.segment_sum(msg, query_idx, num_segments=n_nodes)
    return wV, Z, attn


# ---------------------------------- main ------------------------------------

if __name__ == "__main__":
    in_dim, out_dim, num_heads = 32, 8, 4
    hdim = out_dim * num_heads
    n_nodes, n_edges, n_pairs = 8, 16, 24
    clamp = 5.0

    key = jax.random.PRNGKey(0)
    keys = jax.random.split(key, 20)

    def xavier(k, fan_in, fan_out):
        std = math.sqrt(2.0 / (fan_in + fan_out))
        return (std * jax.random.normal(k, (fan_in, fan_out))).astype(jnp.float32)

    def bias(k, fan_in, n_out):
        b = 1.0 / math.sqrt(fan_in)
        return jax.random.uniform(k, (n_out,), jnp.float32, -b, b)

    params = {
        "T_w": xavier(keys[0], in_dim, in_dim),   "T_b": bias(keys[1], in_dim, in_dim),
        "E_w": xavier(keys[2], in_dim, in_dim),   "E_b": bias(keys[3], in_dim, in_dim),
        "P_w": xavier(keys[4], 3 * in_dim, in_dim), "P_b": bias(keys[5], 3 * in_dim, in_dim),
        "Q_w": xavier(keys[6], in_dim, hdim),     "Q_b": bias(keys[7], in_dim, hdim),
        "K_w": xavier(keys[8], in_dim, hdim),     "K_b": bias(keys[9], in_dim, hdim),
        "V_w": xavier(keys[10], in_dim, hdim),    "V_b": bias(keys[11], in_dim, hdim),
        # nn.Embedding(3, H*D) weight (scaled to keep scores moderate)
        "A_w": (0.2 * jax.random.normal(keys[12], (3, hdim))).astype(jnp.float32),
    }
    # TODO(synk): VeRow (edge_enhance) is declared in __init__ but never used in
    # this forward path, so it is not materialized here.

    x = jax.random.normal(keys[13], (n_nodes, in_dim), jnp.float32)
    edge_attr = jax.random.normal(keys[14], (n_edges, in_dim), jnp.float32)
    edge_index = jax.random.randint(keys[15], (2, n_edges), 0, n_nodes)
    batch_key_idx = jax.random.randint(keys[16], (n_pairs,), 0, n_edges)
    batch_query_idx = jax.random.randint(keys[17], (n_pairs,), 0, n_nodes)
    connectivity = jax.random.randint(keys[18], (n_pairs,), 0, 3)

    wv, Z, attn = forward(params, x, edge_index, edge_attr, batch_key_idx,
                          batch_query_idx, connectivity,
                          num_heads=num_heads, out_dim=out_dim, clamp=clamp)
    jax.block_until_ready((wv, Z, attn))

    wv_r, Z_r, attn_r = reference_forward(params, x, edge_index, edge_attr,
                                          batch_key_idx, batch_query_idx,
                                          connectivity, num_heads=num_heads,
                                          out_dim=out_dim, clamp=clamp)

    np.testing.assert_allclose(np.asarray(Z), np.asarray(Z_r), atol=5e-2, rtol=5e-2)
    np.testing.assert_allclose(np.asarray(attn), np.asarray(attn_r[..., 0]),
                               atol=5e-2, rtol=5e-2)
    np.testing.assert_allclose(np.asarray(wv), np.asarray(wv_r), atol=5e-2, rtol=5e-2)

    print("KERNEL_OK")
</pallas_src>

<mosaic_0001>
module attributes {stable_mosaic.version = 11 : i64} {
  func.func @_linear_kernel(%arg0: i32, %arg1: memref<8x32xf32, #tpu.memory_space<vmem>>, %arg2: memref<32x64xf32, #tpu.memory_space<vmem>>, %arg3: memref<1x64xf32, #tpu.memory_space<vmem>>, %arg4: memref<8x64xf32, #tpu.memory_space<vmem>>) attributes {dimension_semantics = [#tpu.dimension_semantics<parallel>], iteration_bounds = array<i64: 1>, scalar_prefetch = 0 : i64, scratch_operands = 0 : i64, tpu.core_type = #tpu.core_type<tc>, window_params = [{transform_indices = @transform_0, window_bounds = array<i64: 8, 32>}, {pipeline_mode = #tpu.pipeline_mode<synchronous>, transform_indices = @transform_1, window_bounds = array<i64: 32, 64>}, {pipeline_mode = #tpu.pipeline_mode<synchronous>, transform_indices = @transform_2, window_bounds = array<i64: 1, 64>}, {transform_indices = @transform_3, window_bounds = array<i64: 8, 64>}]} {
    %c0 = arith.constant 0 : index
    %c0_0 = arith.constant 0 : index
    %0 = vector.load %arg1[%c0, %c0_0] : memref<8x32xf32, #tpu.memory_space<vmem>>, vector<8x32xf32>
    %c0_1 = arith.constant 0 : index
    %c0_2 = arith.constant 0 : index
    %1 = vector.load %arg2[%c0_1, %c0_2] : memref<32x64xf32, #tpu.memory_space<vmem>>, vector<32x64xf32>
    %cst = arith.constant dense<0.000000e+00> : vector<8x64xf32>
    %2 = tpu.matmul %0, %1, %cst {dimension_numbers = #tpu.dot_dimension_numbers<[1], [0], [0], [1], [0, 0, 1, 1], [], []>} : vector<8x32xf32>, vector<32x64xf32>, vector<8x64xf32> -> vector<8x64xf32>
    %c0_3 = arith.constant 0 : index
    %c0_4 = arith.constant 0 : index
    %3 = vector.load %arg3[%c0_3, %c0_4] : memref<1x64xf32, #tpu.memory_space<vmem>>, vector<1x64xf32>
    %4 = vector.broadcast %3 : vector<1x64xf32> to vector<8x64xf32>
    %5 = arith.addf %2, %4 : vector<8x64xf32>
    %c0_5 = arith.constant 0 : index
    %c0_6 = arith.constant 0 : index
    %6 = vector.load %arg4[%c0_5, %c0_6] : memref<8x64xf32, #tpu.memory_space<vmem>>, vector<8x64xf32>
    tpu.vector_store %arg4[%c0_5, %c0_6], %5 {strides = array<i32>} : memref<8x64xf32, #tpu.memory_space<vmem>>, vector<8x64xf32>,
    return
  }
  func.func @transform_0(%arg0: i32) -> (i32, i32) {
    %c0_i32 = arith.constant 0 : i32
    %c0_i32_0 = arith.constant 0 : i32
    return %arg0, %c0_i32 : i32, i32
  }
  func.func @transform_1(%arg0: i32) -> (i32, i32) {
    %c0_i32 = arith.constant 0 : i32
    %c0_i32_0 = arith.constant 0 : i32
    %c0_i32_1 = arith.constant 0 : i32
    return %c0_i32, %c0_i32_0 : i32, i32
  }
  func.func @transform_2(%arg0: i32) -> (i32, i32) {
    %c0_i32 = arith.constant 0 : i32
    %c0_i32_0 = arith.constant 0 : i32
    %c0_i32_1 = arith.constant 0 : i32
    return %c0_i32, %c0_i32_0 : i32, i32
  }
  func.func @transform_3(%arg0: i32) -> (i32, i32) {
    %c0_i32 = arith.constant 0 : i32
    %c0_i32_0 = arith.constant 0 : i32
    return %arg0, %c0_i32 : i32, i32
  }
}

</mosaic_0001>

<llo_original>
// kernel: tpu_custom_call.1
$region0: #{tpu_custom_call.1}
  #allocation0 [shape = 'u32[]', space=smem, size = 0x4, offset = 0x4, fixed_abs, tag = 'smem constant byte address 0x4 - core index']
  #allocation1 [shape = 'u32[144,128]{1,0:T(1,128)}', space=vmem, size = 0x12000, scoped, tag = 'internal scratch']
  %s0 = inlined_call_operand.hbm [shape: f32[8,32], index: 0, kind: input, shape index: {}]
  %s1 = inlined_call_operand.hbm [shape: f32[32,64], index: 1, kind: input, shape index: {}]
  %s2 = inlined_call_operand.vmem [shape: f32[1,64], index: 2, kind: input, shape index: {}]
  %s3 = inlined_call_operand.hbm [shape: f32[8,64], index: 3, kind: output, shape index: {}]
  %s4 = sld [smem:[#allocation0]]
  $region30: #{tpu_custom_call.1} parent=0
    _
  %s6 = ssub.s32 1, %s4
  %s7 = scalar_select 0, %s6, %s4
  $region1: #{tpu_custom_call.1} parent=0
    #allocation2 [shape = 'u8[4096]{0}', space=vmem, size = 0x1000, scoped, tag = 'input window, operand 0, single buffered']
    #allocation3 [shape = 's32[1]{0}', space=sflag, size = 0x4, scoped, tag = 'scoped memory for tpu_custom_call.1']
    #allocation4 [shape = 's32[1]{0}', space=sflag, size = 0x4, scoped, tag = 'scoped memory for tpu_custom_call.1']
    #allocation5 [shape = 'u8[16384]{0}', space=vmem, size = 0x4000, scoped, tag = 'input window, operand 1, single buffered']
    #allocation6 [shape = 's32[1]{0}', space=sflag, size = 0x4, scoped, tag = 'scoped memory for tpu_custom_call.1']
    #allocation7 [shape = 'u8[4096]{0}', space=vmem, size = 0x1000, scoped, tag = 'output window, operand 0, single buffered']
    %8 = vsyncpa [#allocation3], 0
    %9 = vsyncpa [#allocation6], 0
    %10 = vsyncpa [#allocation4], 0
    // Predicated region
    $region2: #{tpu_custom_call.1} parent=1 // pred_check
      _
    $region3: #{tpu_custom_call.1} parent=1 // pred_check_branch
      %12 = sbr.rel (0) target = $region5
    $region4: #{tpu_custom_call.1} parent=1 // pred_region
      %s14 = ssub.s32 128, 128
      %15 = vsyncadd [#allocation3], %s14
      %s17 = sshll.u32 [#allocation2], 4
      %s18 = int_to_ptr.vmem [resolvable:$true] %s17
      %20 = dma.hbm_to_vmem [thread:$0]  %s0, 128, %s18, [#allocation3]
    $region5: #{tpu_custom_call.1} parent=1 // pred_fallthru
      _
    // Predicated region
    $region6: #{tpu_custom_call.1} parent=1 // pred_check
      _
    $region7: #{tpu_custom_call.1} parent=1 // pred_check_branch
      %22 = sbr.rel (0) target = $region9
    $region8: #{tpu_custom_call.1} parent=1 // pred_region
      %s24 = ssub.s32 512, 512
      %25 = vsyncadd [#allocation6], %s24
      %s26 = sshll.u32 [#allocation5], 4
      %s27 = int_to_ptr.vmem [resolvable:$true] %s26
      %32 = dma.hbm_to_vmem [thread:$0]  %s1, 512, %s27, [#allocation6], 128, 128, 8
    $region9: #{tpu_custom_call.1} parent=1 // pred_fallthru
      _
    // Predicated region
    $region10: #{tpu_custom_call.1} parent=1 // pred_check
      _
    $region11: #{tpu_custom_call.1} parent=1 // pred_check_branch
      %34 = sbr.rel (0) target = $region13
    $region12: #{tpu_custom_call.1} parent=1 // pred_region
      _
    $region13: #{tpu_custom_call.1} parent=1 // pred_fallthru
      _
    // Predicated region
    $region14: #{tpu_custom_call.1} parent=1 // pred_check
      _
    $region15: #{tpu_custom_call.1} parent=1 // pred_check_branch
      %36 = sbr.rel (0) target = $region17
    $region16: #{tpu_custom_call.1} parent=1 // pred_region
      %37 = dma.done [#allocation3], 128
    $region17: #{tpu_custom_call.1} parent=1 // pred_fallthru
      _
    // Predicated region
    $region18: #{tpu_custom_call.1} parent=1 // pred_check
      _
    $region19: #{tpu_custom_call.1} parent=1 // pred_check_branch
      %39 = sbr.rel (0) target = $region21
    $region20: #{tpu_custom_call.1} parent=1 // pred_region
      %40 = dma.done [#allocation6], 512
    $region21: #{tpu_custom_call.1} parent=1 // pred_fallthru
      _
    %v41 = vld [vmem:[#allocation2] sm:$0xff]
    %v42 = vld [vmem:[#allocation5] sm:$0xff]
    %v43 = vld [vmem:[#allocation5 + $0x8] sm:$0xff]
    %v44 = vld [vmem:[#allocation5 + $0x10] sm:$0xff]
    %v45 = vld [vmem:[#allocation5 + $0x18] sm:$0xff]
    %v46 = vld [vmem:[%s2] sm:$0x1]
    %v48 = vlaneseq
    %v49 = vshrl.u32 %v48, 7
    %v50 = vsub.s32 0, %v49
    %v51 = vrot.slane %v46, %v50
    %vm53 = vcmask 261120
    %v55 = vsel %vm53, %v41, 0
    %57 = vmatprep.subr.mxu0 0.0
    %58 = vmatpush1.msra.mxu0 %v42
    %59 = vmatprep.subr.mxu0 0.0
    %60 = vmatpush1.msra.mxu0 %v43
    %61 = vmatprep.subr.mxu0 0.0
    %62 = vmatpush1.msra.mxu0 %v44
    %63 = vmatprep.subr.mxu0 0.0
    %64 = vmatpush1.msra.mxu0 %v45
    %65 = vmatprep.subr.mxu0 0.0
    %66 = vmatpush1.msra.mxu0 0.0
    %67 = vmatprep.subr.mxu0 0.0
    %68 = vmatpush1.msra.mxu0 0.0
    %69 = vmatprep.subr.mxu0 0.0
    %70 = vmatpush1.msra.mxu0 0.0
    %71 = vmatprep.subr.mxu0 0.0
    %72 = vmatpush1.msra.mxu0 0.0
    %73 = vmatprep.subr.mxu0 0.0
    %74 = vmatpush1.msra.mxu0 0.0
    %75 = vmatprep.subr.mxu0 0.0
    %76 = vmatpush1.msra.mxu0 0.0
    %77 = vmatprep.subr.mxu0 0.0
    %78 = vmatpush1.msra.mxu0 0.0
    %79 = vmatprep.subr.mxu0 0.0
    %80 = vmatpush1.msra.mxu0 0.0
    %81 = vmatprep.subr.mxu0 0.0
    %82 = vmatpush1.msra.mxu0 0.0
    %83 = vmatprep.subr.mxu0 0.0
    %84 = vmatpush1.msra.mxu0 0.0
    %85 = vmatprep.subr.mxu0 0.0
    %86 = vmatpush1.msra.mxu0 0.0
    %87 = vmatprep.subr.mxu0 0.0
    %88 = vmatpush1.msra.mxu0 0.0
    %89 = vmatprep.subr.mxu0 0.0
    %90 = vmatpush1.msra.mxu0 0.0
    %91 = vmatprep.subr.mxu0 0.0
    %92 = vmatpush1.msra.mxu0 0.0
    %93 = vmatprep.subr.mxu0 0.0
    %94 = vmatpush1.msra.mxu0 0.0
    %95 = vmatprep.subr.mxu0 0.0
    %96 = vmatpush1.msra.mxu0 0.0
    %97 = vmatprep.subr.mxu0 0.0
    %98 = vmatpush1.msra.mxu0 0.0
    %99 = vmatprep.subr.mxu0 0.0
    %100 = vmatpush1.msra.mxu0 0.0
    %101 = vmatprep.subr.mxu0 0.0
    %102 = vmatpush1.msra.mxu0 0.0
    %103 = vmatprep.subr.mxu0 0.0
    %104 = vmatpush1.msra.mxu0 0.0
    %105 = vmatprep.subr.mxu0 0.0
    %106 = vmatpush1.msra.mxu0 0.0
    %107 = vmatprep.subr.mxu0 0.0
    %108 = vmatpush1.msra.mxu0 0.0
    %109 = vmatprep.subr.mxu0 0.0
    %110 = vmatpush1.msra.mxu0 0.0
    %111 = vmatprep.subr.mxu0 0.0
    %112 = vmatpush1.msra.mxu0 0.0
    %113 = vmatprep.subr.mxu0 0.0
    %114 = vmatpush1.msra.mxu0 0.0
    %115 = vmatprep.subr.mxu0 0.0
    %116 = vmatpush1.msra.mxu0 0.0
    %117 = vmatprep.subr.mxu0 0.0
    %118 = vmatpush1.msra.mxu0 0.0
    %119 = vmatprep.subr.mxu0 0.0
    %120 = vmatpush1.msra.mxu0 0.0
    %121 = vmatprep.mubr.f32.mxu0 0.0
    %122 = vmatmul.mubr.f32.gmra.mrb[0].mxu0 %v55
    %v123 = vpop.f32.mrb[0].mxu0
    %v124 = vadd.f32 %v51, %v123
    %v125 = vpop.f32.mrb[0].mxu0
    %126 = vdwg.mxu0
    %vm127 = vcmask 523264
    %128 = vst.msk [vmem:[#allocation7] sm:$0xff] %vm127, %v124
    // Predicated region
    $region22: #{tpu_custom_call.1} parent=1 // pred_check
      _
    $region23: #{tpu_custom_call.1} parent=1 // pred_check_branch
      %130 = sbr.rel (0) target = $region25
    $region24: #{tpu_custom_call.1} parent=1 // pred_region
      %s132 = ssub.s32 128, 128
      %133 = vsyncadd [#allocation4], %s132
      %s135 = sshll.u32 [#allocation7], 4
      %s136 = int_to_ptr.vmem [resolvable:$true] %s135
      %138 = dma.vmem_to_hbm [thread:$0]  %s136, 128, %s3, [#allocation4]
    $region25: #{tpu_custom_call.1} parent=1 // pred_fallthru
      _
    // Predicated region
    $region26: #{tpu_custom_call.1} parent=1 // pred_check
      _
    $region27: #{tpu_custom_call.1} parent=1 // pred_check_branch
      %140 = sbr.rel (0) target = $region29
    $region28: #{tpu_custom_call.1} parent=1 // pred_region
      %141 = dma.done [#allocation4], 128
    $region29: #{tpu_custom_call.1} parent=1 // pred_fallthru
      _
    %142 = vsyncpa [#allocation3], 1
    %143 = vsyncpa [#allocation6], 1
    %144 = vsyncpa [#allocation4], 1

</llo_original>
